<compile_context>
chip_gen: v6e
topology: v6e:2x2x1
jax: 0.10.0
libtpu: 0.0.40
codegen_flags: <defaults>
</compile_context>

<pallas_src>
import functools

import numpy as np
import jax
import jax.numpy as jnp
from jax.experimental import pallas as pl
from jax.experimental.pallas import tpu as pltpu

GGML_QUANT_SIZES = {"Q4_0": (32, 2 + 16), "Q8_0": (32, 2 + 32)}


def _round_up(a, b):
    return (a + b - 1) // b * b


# ---------------------------------------------------------------------------
# Pallas kernels: fused dequantize (GGUF block format) + matmul (+ bias)
# Grid = (j = N/tn, i = M/tm, k = K/tk); j "parallel", i / k "arbitrary".
# ---------------------------------------------------------------------------
def _q4_0_kernel(x_ref, qs_ref, d_ref, b_ref, o_ref, acc_ref, w_col_ref, *, dq_dtype):
    # x_ref    : (tm, tk)        bf16  activations, K cols pre-permuted to [lo | hi] per tile
    # qs_ref   : (tk//2, tn)     uint8 packed nibbles, K-major
    # d_ref    : (tk//32, tn)    f32   per-block scales, K-major
    # b_ref    : (1, tn)         f32   bias
    # o_ref    : (tm, tn)              output
    # acc_ref  : (tm, tn)        f32   accumulator (lives across the k loop)
    # w_col_ref: (K/tk, tk, tn)  bf16  persistent dequantized W^T column for the current j
    i = pl.program_id(1)
    k = pl.program_id(2)

    @pl.when(k == 0)
    def _():
        acc_ref[...] = jnp.zeros_like(acc_ref)

    # Dequantize this K-tile only for the first M tile of the current j column;
    # all later i steps reuse the persistent VMEM copy (dedup across M).
    @pl.when(i == 0)
    def _():
        half, tn = qs_ref.shape
        g = d_ref.shape[0]                                    # tk // 32 blocks in this tile
        q = qs_ref[...].astype(jnp.int32)                     # zero-extended packed bytes
        s = d_ref[...].astype(dq_dtype)[:, None, :]           # (g, 1, tn)
        lo = ((q & 15) - 8).astype(jnp.float32).astype(dq_dtype)   # block elems 0..15
        hi = ((q >> 4) - 8).astype(jnp.float32).astype(dq_dtype)   # block elems 16..31
        w_lo = (lo.reshape(g, 16, tn) * s).reshape(half, tn).astype(jnp.bfloat16)
        w_hi = (hi.reshape(g, 16, tn) * s).reshape(half, tn).astype(jnp.bfloat16)
        w_col_ref[k, :half, :] = w_lo                         # lane-dense, unmasked stores
        w_col_ref[k, half:, :] = w_hi

    acc_ref[...] += jax.lax.dot_general(
        x_ref[...], w_col_ref[k], (((1,), (0,)), ((), ())),
        preferred_element_type=jnp.float32)

    @pl.when(k == pl.num_programs(2) - 1)
    def _():
        o_ref[...] = (acc_ref[...] + b_ref[...]).astype(o_ref.dtype)


def _q8_0_kernel(x_ref, qs_ref, d_ref, b_ref, o_ref, acc_ref, w_col_ref, *, dq_dtype):
    # qs_ref: (tk, tn) int8, K-major ; d_ref: (tk//32, tn) f32
    i = pl.program_id(1)
    k = pl.program_id(2)

    @pl.when(k == 0)
    def _():
        acc_ref[...] = jnp.zeros_like(acc_ref)

    @pl.when(i == 0)
    def _():
        tk, tn = qs_ref.shape
        g = d_ref.shape[0]
        q = qs_ref[...].astype(jnp.float32).astype(dq_dtype)   # int8 values exact in bf16
        s = d_ref[...].astype(dq_dtype)[:, None, :]            # (g, 1, tn)
        w_col_ref[k] = (q.reshape(g, 32, tn) * s).reshape(tk, tn).astype(jnp.bfloat16)

    acc_ref[...] += jax.lax.dot_general(
        x_ref[...], w_col_ref[k], (((1,), (0,)), ((), ())),
        preferred_element_type=jnp.float32)

    @pl.when(k == pl.num_programs(2) - 1)
    def _():
        o_ref[...] = (acc_ref[...] + b_ref[...]).astype(o_ref.dtype)


# ---------------------------------------------------------------------------
# Module wrapper == WQLinear_GGUF (weight prep once, forward = pallas_call)
# ---------------------------------------------------------------------------
class WQLinearGGUF:
    """GGUF Q4_0 / Q8_0 quantized linear: y = x @ dequant(qweight).T + bias."""

    def __init__(self, qweight_u8, bias_f16, qtype, *,
                 dequant_dtype=jnp.bfloat16,       # use jnp.float32 on v5e (no bf16 VALU)
                 tile_m=512, tile_n=256, tile_k=512):
        if qtype not in GGML_QUANT_SIZES:
            raise ValueError(f"Unknown qtype: {qtype}")
        block_size, type_size = GGML_QUANT_SIZES[qtype]
        qw = np.asarray(qweight_u8, dtype=np.uint8)
        N, k_bytes = qw.shape
        assert k_bytes % type_size == 0
        nb = k_bytes // type_size
        K = nb * block_size

        # ---- one-time host-side weight prep (hoisted out of the forward path) ----
        # TODO(synk): the fp16 scale decode assumes a little-endian host (as GGUF itself).
        blocks = qw.reshape(N, nb, type_size)
        d = (np.ascontiguousarray(blocks[:, :, :2]).view(np.float16)
             .reshape(N, nb).astype(np.float32))
        self.d_t = jnp.asarray(np.ascontiguousarray(d.T))                # (K//32, N) f32
        payload = np.ascontiguousarray(blocks[:, :, 2:])
        if qtype == "Q4_0":
            self.qs_t = jnp.asarray(np.ascontiguousarray(
                payload.reshape(N, K // 2).T))                           # (K//2, N) uint8
        else:  # Q8_0
            self.qs_t = jnp.asarray(np.ascontiguousarray(
                payload.reshape(N, K).view(np.int8).T))                  # (K, N)    int8

        self.bias2d = (jnp.zeros((1, N), jnp.float32) if bias_f16 is None
                       else jnp.asarray(bias_f16, dtype=jnp.float32).reshape(1, N))
        self.qtype = qtype
        self.K, self.N = K, N
        self.dq_dtype = dequant_dtype
        self.tile_m, self.tile_n, self.tile_k = tile_m, tile_n, tile_k

    def __call__(self, x):
        K, N = self.K, self.N
        x = jnp.asarray(x)
        lead = x.shape[:-1]
        assert x.shape[-1] == K, "in_features mismatch"
        x2 = x.reshape(-1, K)
        M = x2.shape[0]
        out_dtype = x.dtype

        tn = min(self.tile_n, N)
        tk = min(self.tile_k, K)
        assert N % tn == 0 and tn % 128 == 0
        assert K % tk == 0 and tk % 32 == 0 and (tk % 256 == 0 or tk == K)
        # TODO(synk): pad N / K wrapper-side for weights that violate these asserts.

        # M padding so decode batches 1..7 (and any non-multiple M) work.
        tm = _round_up(min(self.tile_m, _round_up(M, 16)), 16)
        m_pad = _round_up(M, tm)

        # cast to bf16 BEFORE the Q4_0 [lo|hi] permutation (halves the relayout traffic)
        xk = x2.astype(jnp.bfloat16)
        if self.qtype == "Q4_0":
            # One-time O(M*K) column permutation so the kernel writes the [lo | hi] nibble
            # halves of each K-tile contiguously (no 16-row interleaved scatter).
            nbt = tk // 32
            xk = xk.reshape(M, K // tk, nbt, 2, 16).transpose(0, 1, 3, 2, 4).reshape(M, K)
            qs_block = (tk // 2, tn)
            kernel = functools.partial(_q4_0_kernel, dq_dtype=self.dq_dtype)
        else:
            qs_block = (tk, tn)
            kernel = functools.partial(_q8_0_kernel, dq_dtype=self.dq_dtype)
        if m_pad != M:
            xk = jnp.pad(xk, ((0, m_pad - M), (0, 0)))

        num_k = K // tk
        d_block = (tk // 32, tn)
        grid = (N // tn, m_pad // tm, num_k)            # (j, i, k): k innermost accumulation

        # VMEM footprint estimate; raise the scoped limit only when needed (cap for v7x HW).
        est = (2 * tm * tk * 2                           # x tiles (bf16, double-buffered)
               + 2 * qs_block[0] * tn                    # quant payload
               + 2 * d_block[0] * tn * 4                 # scales
               + 2 * tn * 4                              # bias
               + 2 * tm * tn * jnp.dtype(out_dtype).itemsize
               + tm * tn * 4                             # f32 accumulator
               + num_k * tk * tn * 2)                    # persistent W^T column (bf16)
        compiler_kwargs = dict(dimension_semantics=("parallel", "arbitrary", "arbitrary"))
        if est > 24 * 1024 * 1024:
            compiler_kwargs["vmem_limit_bytes"] = min(int(est * 1.25) + (2 << 20), 100 << 20)

        out = pl.pallas_call(
            kernel,
            out_shape=jax.ShapeDtypeStruct((m_pad, N), out_dtype),
            grid_spec=pltpu.PrefetchScalarGridSpec(
                num_scalar_prefetch=0,
                grid=grid,
                in_specs=[
                    pl.BlockSpec((tm, tk), lambda j, i, k: (i, k)),       # x (bf16, permuted)
                    pl.BlockSpec(qs_block, lambda j, i, k: (k, j)),       # quant payload
                    pl.BlockSpec(d_block, lambda j, i, k: (k, j)),        # block scales
                    pl.BlockSpec((1, tn), lambda j, i, k: (0, j)),        # bias
                ],
                out_specs=pl.BlockSpec((tm, tn), lambda j, i, k: (i, j)),
                scratch_shapes=[
                    pltpu.VMEM((tm, tn), jnp.float32),                # f32 accumulator
                    pltpu.VMEM((num_k, tk, tn), jnp.bfloat16),        # persistent W^T column
                ],
            ),
            compiler_params=pltpu.CompilerParams(**compiler_kwargs),
        )(xk, self.qs_t, self.d_t, self.bias2d)

        if m_pad != M:
            out = out[:M]
        return out.reshape(*lead, N)


# ---------------------------------------------------------------------------
# Deterministic synthetic parameter construction + pure-numpy reference
# ---------------------------------------------------------------------------
def _make_qweight(key, N, K, qtype):
    block_size, type_size = GGML_QUANT_SIZES[qtype]
    nb = K // block_size
    kd, kq = jax.random.split(key)
    d = jax.random.uniform(kd, (N, nb), minval=0.02, maxval=0.2,
                           dtype=jnp.float32).astype(jnp.float16)
    payload = jax.random.randint(kq, (N, nb, type_size - 2), 0, 256,
                                 dtype=jnp.int32).astype(jnp.uint8)
    d_bytes = np.asarray(d).view(np.uint8).reshape(N, nb, 2)
    return np.concatenate([d_bytes, np.asarray(payload)],
                          axis=-1).reshape(N, nb * type_size)


def _dequantize_ref(qweight_np, qtype):
    """Mirrors dequantize_blocks_Q4_0 / Q8_0 (f32). Returns (w, scale_expanded, int_vals)."""
    block_size, type_size = GGML_QUANT_SIZES[qtype]
    N, k_bytes = qweight_np.shape
    nb = k_bytes // type_size
    K = nb * block_size
    blocks = qweight_np.reshape(-1, type_size)
    d = np.ascontiguousarray(blocks[:, :2]).view(np.float16).astype(np.float32)  # (N*nb, 1)
    if qtype == "Q4_0":
        qs = blocks[:, 2:]
        qs = qs.reshape(-1, 1, 1, block_size // 2) >> np.array(
            [0, 4], np.uint8).reshape(1, 1, 2, 1)
        qs = (qs & 15).reshape(-1, block_size).astype(np.int8).astype(np.float32) - 8.0
    else:
        qs = np.ascontiguousarray(blocks[:, 2:]).view(np.int8).astype(np.float32)
    d_exp = np.repeat(d, block_size, axis=1).reshape(N, K)
    q_vals = qs.reshape(N, K)
    return d_exp * q_vals, d_exp, q_vals


if __name__ == "__main__":
    key = jax.random.PRNGKey(0)
    kx, kb, kw4, kw8 = jax.random.split(key, 4)
    # small shapes; M=20 deliberately not a tile multiple to exercise the M-padding path
    M, K, N = 20, 512, 512

    x = jax.random.normal(kx, (M, K), dtype=jnp.float32)
    bias = jax.random.normal(kb, (N,), dtype=jnp.float32).astype(jnp.float16)
    bias_f32 = np.asarray(bias, np.float32)

    for qtype, kw in (("Q4_0", kw4), ("Q8_0", kw8)):
        qweight = _make_qweight(kw, N, K, qtype)
        w_exact, d_exp, q_vals = _dequantize_ref(qweight, qtype)     # torch-equivalent dequant
        y_exact = np.asarray(x, np.float64) @ w_exact.T.astype(np.float64) + bias_f32[None, :]

        for dq_dtype in (jnp.bfloat16, jnp.float32):                 # bf16: v6e/v7x, f32: v5e
            # small tiles -> real (2, 2, 2) grid incl. K accumulation and W reuse (i > 0)
            layer = WQLinearGGUF(qweight, bias, qtype, dequant_dtype=dq_dtype,
                                 tile_m=16, tile_n=256, tile_k=256)
            y = np.asarray(jax.block_until_ready(layer(x)))
            assert y.shape == (M, N)

            # tight check vs an emulation of the kernel numerics (bf16 dequant/MXU, f32 acc)
            if dq_dtype == jnp.bfloat16:
                w_k = np.asarray((jnp.asarray(q_vals).astype(jnp.bfloat16) *
                                  jnp.asarray(d_exp).astype(jnp.bfloat16)).astype(jnp.float32))
            else:
                w_k = np.asarray(jnp.asarray(w_exact).astype(jnp.bfloat16).astype(jnp.float32))
            xb = np.asarray(jnp.asarray(x).astype(jnp.bfloat16).astype(jnp.float32))
            y_emul = xb.astype(np.float64) @ w_k.T.astype(np.float64) + bias_f32[None, :]
            np.testing.assert_allclose(y, y_emul, rtol=3e-3, atol=3e-2)

            # loose check against exact fp32 torch semantics (bf16 quantization noise only)
            atol = 2e-2 * float(np.abs(y_exact).max()) + 0.1
            np.testing.assert_allclose(y, y_exact, rtol=1e-1, atol=atol)

    print("KERNEL_OK")
</pallas_src>

<mosaic_0001>
module attributes {stable_mosaic.version = 11 : i64} {
  func.func @_q4_0_kernel(%arg0: i32, %arg1: i32, %arg2: i32, %arg3: memref<16x256xbf16, #tpu.memory_space<vmem>>, %arg4: memref<128x256xi8, #tpu.memory_space<vmem>>, %arg5: memref<8x256xf32, #tpu.memory_space<vmem>>, %arg6: memref<1x256xf32, #tpu.memory_space<vmem>>, %arg7: memref<16x256xf32, #tpu.memory_space<vmem>>, %arg8: memref<16x256xf32, #tpu.memory_space<vmem>>, %arg9: memref<2x256x256xbf16, #tpu.memory_space<vmem>>) attributes {dimension_semantics = [#tpu.dimension_semantics<parallel>, #tpu.dimension_semantics<arbitrary>, #tpu.dimension_semantics<arbitrary>], iteration_bounds = array<i64: 2, 2, 2>, scalar_prefetch = 0 : i64, scratch_operands = 2 : i64, tpu.core_type = #tpu.core_type<tc>, window_params = [{transform_indices = @transform_0, window_bounds = array<i64: 16, 256>}, {transform_indices = @transform_1, window_bounds = array<i64: 128, 256>}, {transform_indices = @transform_2, window_bounds = array<i64: 8, 256>}, {transform_indices = @transform_3, window_bounds = array<i64: 1, 256>}, {transform_indices = @transform_4, window_bounds = array<i64: 16, 256>}]} {
    %c0_i32 = arith.constant 0 : i32
    %0 = arith.cmpi eq, %arg2, %c0_i32 : i32
    %1 = arith.extui %0 : i1 to i32
    %c0_i32_0 = arith.constant 0 : i32
    %2 = arith.cmpi ne, %1, %c0_i32_0 : i32
    scf.if %2 {
      %cst_11 = arith.constant 0.000000e+00 : f32
      %17 = vector.broadcast %cst_11 : f32 to vector<16x256xf32>
      %c0_12 = arith.constant 0 : index
      %c0_13 = arith.constant 0 : index
      %18 = vector.load %arg8[%c0_12, %c0_13] : memref<16x256xf32, #tpu.memory_space<vmem>>, vector<16x256xf32>
      tpu.vector_store %arg8[%c0_12, %c0_13], %17 {strides = array<i32>} : memref<16x256xf32, #tpu.memory_space<vmem>>, vector<16x256xf32>,
    } else {
    }
    %c0_i32_1 = arith.constant 0 : i32
    %3 = arith.cmpi eq, %arg1, %c0_i32_1 : i32
    %4 = arith.extui %3 : i1 to i32
    %c0_i32_2 = arith.constant 0 : i32
    %5 = arith.cmpi ne, %4, %c0_i32_2 : i32
    scf.if %5 {
      %c0_11 = arith.constant 0 : index
      %c0_12 = arith.constant 0 : index
      %17 = vector.load %arg4[%c0_11, %c0_12] : memref<128x256xi8, #tpu.memory_space<vmem>>, vector<128x256xi8>
      %18 = arith.extui %17 : vector<128x256xi8> to vector<128x256xi32>
      %c0_13 = arith.constant 0 : index
      %c0_14 = arith.constant 0 : index
      %19 = vector.load %arg5[%c0_13, %c0_14] : memref<8x256xf32, #tpu.memory_space<vmem>>, vector<8x256xf32>
      %20 = arith.truncf %19 : vector<8x256xf32> to vector<8x256xbf16>
      %21 = vector.shape_cast %20 : vector<8x256xbf16> to vector<8x1x256xbf16>
      %c15_i32 = arith.constant 15 : i32
      %22 = vector.broadcast %c15_i32 : i32 to vector<128x256xi32>
      %23 = arith.andi %18, %22 : vector<128x256xi32>
      %c8_i32 = arith.constant 8 : i32
      %24 = vector.broadcast %c8_i32 : i32 to vector<128x256xi32>
      %25 = arith.subi %23, %24 : vector<128x256xi32>
      %26 = arith.sitofp %25 : vector<128x256xi32> to vector<128x256xf32>
      %27 = arith.truncf %26 : vector<128x256xf32> to vector<128x256xbf16>
      %c4_i32 = arith.constant 4 : i32
      %28 = vector.broadcast %c4_i32 : i32 to vector<128x256xi32>
      %29 = arith.shrsi %18, %28 : vector<128x256xi32>
      %c8_i32_15 = arith.constant 8 : i32
      %30 = vector.broadcast %c8_i32_15 : i32 to vector<128x256xi32>
      %31 = arith.subi %29, %30 : vector<128x256xi32>
      %32 = arith.sitofp %31 : vector<128x256xi32> to vector<128x256xf32>
      %33 = arith.truncf %32 : vector<128x256xf32> to vector<128x256xbf16>
      %34 = vector.shape_cast %27 : vector<128x256xbf16> to vector<8x16x256xbf16>
      %35 = vector.broadcast %21 : vector<8x1x256xbf16> to vector<8x16x256xbf16>
      %36 = arith.mulf %34, %35 : vector<8x16x256xbf16>
      %37 = vector.shape_cast %36 : vector<8x16x256xbf16> to vector<128x256xbf16>
      %38 = vector.shape_cast %33 : vector<128x256xbf16> to vector<8x16x256xbf16>
      %39 = vector.broadcast %21 : vector<8x1x256xbf16> to vector<8x16x256xbf16>
      %40 = arith.mulf %38, %39 : vector<8x16x256xbf16>
      %41 = vector.shape_cast %40 : vector<8x16x256xbf16> to vector<128x256xbf16>
      %42 = arith.index_cast %arg2 : i32 to index
      %c0_16 = arith.constant 0 : index
      %c0_17 = arith.constant 0 : index
      %43 = vector.load %arg9[%42, %c0_16, %c0_17] : memref<2x256x256xbf16, #tpu.memory_space<vmem>>, vector<1x128x256xbf16>
      %44 = vector.shape_cast %43 : vector<1x128x256xbf16> to vector<128x256xbf16>
      %45 = vector.shape_cast %37 : vector<128x256xbf16> to vector<1x128x256xbf16>
      tpu.vector_store %arg9[%42, %c0_16, %c0_17], %45 {strides = array<i32>} : memref<2x256x256xbf16, #tpu.memory_space<vmem>>, vector<1x128x256xbf16>,
      %46 = arith.index_cast %arg2 : i32 to index
      %c128 = arith.constant 128 : index
      %c0_18 = arith.constant 0 : index
      %47 = vector.load %arg9[%46, %c128, %c0_18] : memref<2x256x256xbf16, #tpu.memory_space<vmem>>, vector<1x128x256xbf16>
      %48 = vector.shape_cast %47 : vector<1x128x256xbf16> to vector<128x256xbf16>
      %49 = vector.shape_cast %41 : vector<128x256xbf16> to vector<1x128x256xbf16>
      tpu.vector_store %arg9[%46, %c128, %c0_18], %49 {strides = array<i32>} : memref<2x256x256xbf16, #tpu.memory_space<vmem>>, vector<1x128x256xbf16>,
    } else {
    }
    %c0 = arith.constant 0 : index
    %c0_3 = arith.constant 0 : index
    %6 = vector.load %arg8[%c0, %c0_3] : memref<16x256xf32, #tpu.memory_space<vmem>>, vector<16x256xf32>
    %c0_4 = arith.constant 0 : index
    %c0_5 = arith.constant 0 : index
    %7 = vector.load %arg3[%c0_4, %c0_5] : memref<16x256xbf16, #tpu.memory_space<vmem>>, vector<16x256xbf16>
    %8 = arith.index_cast %arg2 : i32 to index
    %c0_6 = arith.constant 0 : index
    %c0_7 = arith.constant 0 : index
    %9 = vector.load %arg9[%8, %c0_6, %c0_7] : memref<2x256x256xbf16, #tpu.memory_space<vmem>>, vector<1x256x256xbf16>
    %10 = vector.shape_cast %9 : vector<1x256x256xbf16> to vector<256x256xbf16>
    %cst = arith.constant dense<0.000000e+00> : vector<16x256xf32>
    %11 = tpu.matmul %7, %10, %cst {dimension_numbers = #tpu.dot_dimension_numbers<[1], [0], [0], [1], [0, 0, 1, 1], [], []>} : vector<16x256xbf16>, vector<256x256xbf16>, vector<16x256xf32> -> vector<16x256xf32>
    %12 = arith.addf %6, %11 : vector<16x256xf32>
    %c0_8 = arith.constant 0 : index
    %c0_9 = arith.constant 0 : index
    %13 = vector.load %arg8[%c0_8, %c0_9] : memref<16x256xf32, #tpu.memory_space<vmem>>, vector<16x256xf32>
    tpu.vector_store %arg8[%c0_8, %c0_9], %12 {strides = array<i32>} : memref<16x256xf32, #tpu.memory_space<vmem>>, vector<16x256xf32>,
    %c1_i32 = arith.constant 1 : i32
    %14 = arith.cmpi eq, %arg2, %c1_i32 : i32
    %15 = arith.extui %14 : i1 to i32
    %c0_i32_10 = arith.constant 0 : i32
    %16 = arith.cmpi ne, %15, %c0_i32_10 : i32
    scf.if %16 {
      %c0_11 = arith.constant 0 : index
      %c0_12 = arith.constant 0 : index
      %17 = vector.load %arg8[%c0_11, %c0_12] : memref<16x256xf32, #tpu.memory_space<vmem>>, vector<16x256xf32>
      %c0_13 = arith.constant 0 : index
      %c0_14 = arith.constant 0 : index
      %18 = vector.load %arg6[%c0_13, %c0_14] : memref<1x256xf32, #tpu.memory_space<vmem>>, vector<1x256xf32>
      %19 = vector.broadcast %18 : vector<1x256xf32> to vector<16x256xf32>
      %20 = arith.addf %17, %19 : vector<16x256xf32>
      %c0_15 = arith.constant 0 : index
      %c0_16 = arith.constant 0 : index
      %21 = vector.load %arg7[%c0_15, %c0_16] : memref<16x256xf32, #tpu.memory_space<vmem>>, vector<16x256xf32>
      tpu.vector_store %arg7[%c0_15, %c0_16], %20 {strides = array<i32>} : memref<16x256xf32, #tpu.memory_space<vmem>>, vector<16x256xf32>,
    } else {
    }
    return
  }
  func.func @transform_0(%arg0: i32, %arg1: i32, %arg2: i32) -> (i32, i32) {
    %c0_i32 = arith.constant 0 : i32
    return %arg1, %arg2 : i32, i32
  }
  func.func @transform_1(%arg0: i32, %arg1: i32, %arg2: i32) -> (i32, i32) {
    %c0_i32 = arith.constant 0 : i32
    return %arg2, %arg0 : i32, i32
  }
  func.func @transform_2(%arg0: i32, %arg1: i32, %arg2: i32) -> (i32, i32) {
    %c0_i32 = arith.constant 0 : i32
    return %arg2, %arg0 : i32, i32
  }
  func.func @transform_3(%arg0: i32, %arg1: i32, %arg2: i32) -> (i32, i32) {
    %c0_i32 = arith.constant 0 : i32
    %c0_i32_0 = arith.constant 0 : i32
    return %c0_i32, %arg0 : i32, i32
  }
  func.func @transform_4(%arg0: i32, %arg1: i32, %arg2: i32) -> (i32, i32) {
    %c0_i32 = arith.constant 0 : i32
    return %arg1, %arg0 : i32, i32
  }
}

</mosaic_0001>

<llo_original>
// kernel: tpu_custom_call.1
$region0: #{tpu_custom_call.1}
  #allocation0 [shape = 'u32[]', space=smem, size = 0x4, offset = 0x4, fixed_abs, tag = 'smem constant byte address 0x4 - core index']
  #allocation1 [shape = 'u32[144,128]{1,0:T(1,128)}', space=vmem, size = 0x12000, scoped, tag = 'internal scratch']
  #allocation2 [shape = 'f32[16,256]{1,0:T(8,128)}', space=vmem, size = 0x4000, scoped, tag = 'scratch operand']
  #allocation3 [shape = 'bf16[2,256,256]{2,1,0:T(8,128)(2,1)}', space=vmem, size = 0x40000, scoped, tag = 'scratch operand']
  %s0 = inlined_call_operand.hbm [shape: bf16[32,512], index: 0, kind: input, shape index: {}]
  %s1 = inlined_call_operand.hbm [shape: u8[256,512], index: 1, kind: input, shape index: {}]
  %s2 = inlined_call_operand.hbm [shape: f32[16,512], index: 2, kind: input, shape index: {}]
  %s3 = inlined_call_operand.vmem [shape: f32[1,512], index: 3, kind: input, shape index: {}]
  %s4 = inlined_call_operand.hbm [shape: f32[32,512], index: 4, kind: output, shape index: {}]
  %s5 = sld [smem:[#allocation0]]
  $region73: #{tpu_custom_call.1} parent=0
    _
  %s7 = ssub.s32 1, %s5
  %s8 = scalar_select 0, %s7, %s5
  $region1: #{tpu_custom_call.1} parent=0
    #allocation4 [shape = 'u8[16384]{0}', space=vmem, size = 0x4000, scoped, tag = 'input window, operand 0']
    #allocation5 [shape = 's32[2]{0}', space=sflag, size = 0x8, scoped, tag = 'scoped memory for tpu_custom_call.1']
    #allocation6 [shape = 's32[2]{0}', space=sflag, size = 0x8, scoped, tag = 'scoped memory for tpu_custom_call.1']
    #allocation7 [shape = 'u8[65536]{0}', space=vmem, size = 0x10000, scoped, tag = 'input window, operand 1']
    #allocation8 [shape = 's32[2]{0}', space=sflag, size = 0x8, scoped, tag = 'scoped memory for tpu_custom_call.1']
    #allocation9 [shape = 'u8[16384]{0}', space=vmem, size = 0x4000, scoped, tag = 'input window, operand 2']
    #allocation10 [shape = 'u8[32768]{0}', space=vmem, size = 0x8000, scoped, tag = 'output window, operand 0']
    %9 = vsyncpa [#allocation5], 0
    %s10 = scalar_lea.sflag [#allocation5], 1
    %11 = vsyncpa %s10, 0
    %12 = vsyncpa [#allocation8], 0
    %s13 = scalar_lea.sflag [#allocation8], 1
    %14 = vsyncpa %s13, 0
    %15 = vsyncpa [#allocation6], 0
    %s16 = scalar_lea.sflag [#allocation6], 1
    %17 = vsyncpa %s16, 0
    loop: start=0, step=1, limit=10
    $region2: #{tpu_custom_call.1} parent=1 // loop_pre_header
      _
    $region3: #{tpu_custom_call.1} parent=1 // loop_header
      %s19 = sphi 0, %s23
      %p20 = scmp.ge.s32.totalorder %s19, 10
      %s26 = sphi 0, %s45
      %s27 = sphi 0, %s41
      %s28 = sphi 0, %s37
      %s29 = sphi 0, %s26
      %s30 = sphi 0, %s27
      %s31 = sphi 0, %s28
      %s32 = sphi 0, %s29
      %s33 = sphi 0, %s30
      %s34 = sphi 0, %s31
      %s50 = sphi 0, %s52
      %s53 = sphi 0, %s50
      %s54 = sphi 0, %s53
      %s70 = sphi 0, %s54
      %s78 = sphi 0, %s80
      %s81 = sphi 0, %s78
      %s82 = sphi 0, %s81
      %s98 = sphi 0, %s82
      %s106 = sphi 0, %s108
      %s109 = sphi 0, %s106
      %s110 = sphi 0, %s109
      %s126 = sphi 0, %s110
      %s132 = sphi 0, %s134
      %s135 = sphi 0, %s132
      %s136 = sphi 0, %s135
      %s152 = sphi 0, %s136
      %s160 = sphi 0, %s162
      %s163 = sphi 0, %s160
      %s164 = sphi 0, %s163
      %s180 = sphi 0, %s164
    $region4: #{tpu_custom_call.1} parent=1 // loop_header_branch
      %22 = sbr.rel (%p20) target = $region8
    $region5: #{tpu_custom_call.1} parent=1 // loop_body
      %s24 = ssub.s32 %s19, 1
      %s25 = ssub.s32 %s19, 2
      %s35 = sadd.s32 1, %s28
      %p36 = scmp.ge.s32.totalorder %s35, 2
      %s37 = scalar_select %p36, 0, %s35
      %s38 = sadd.s32 1, %s27
      %s39 = scalar_select %p36, %s38, %s27
      %p40 = scmp.ge.s32.totalorder %s39, 2
      %s41 = scalar_select %p40, 0, %s39
      %s42 = sadd.s32 1, %s26
      %s43 = scalar_select %p40, %s42, %s26
      %p44 = scmp.ge.s32.totalorder %s43, 2
      %s45 = scalar_select %p44, 0, %s43
      %s46 = ssub.s32 %s27, %s41
      %s47 = ssub.s32 %s28, %s37
      %s48 = sor.u32 %s46, %s47
      %p49 = scmp.eq.s32.totalorder %s48, 0
      %s51 = sadd.s32 %s50, 1
      %s52 = scalar_select %p49, %s50, %s51
      %p55 = pneg %p49
      %p56 = scmp.eq.s32.totalorder %s19, 7
      %p57 = por %p55, %p56
      %p58 = scmp.ne.s32.totalorder %s50, %s53
      %p59 = scmp.eq.s32.totalorder %s19, 0
      %p60 = por %p58, %p59
      %p61 = scmp.ne.s32.totalorder %s50, %s53
      %p62 = scmp.eq.s32.totalorder %s24, 7
      %p63 = por %p61, %p62
      %p64 = scmp.ne.s32.totalorder %s53, %s54
      %p65 = scmp.eq.s32.totalorder %s24, 0
      %p66 = por %p64, %p65
      %p67 = scmp.ne.s32.totalorder %s53, %s54
      %p68 = scmp.eq.s32.totalorder %s25, 7
      %p69 = por %p67, %p68
      %p71 = scmp.ne.s32.totalorder %s54, %s70
      %p72 = scmp.eq.s32.totalorder %s25, 0
      %p73 = por %p71, %p72
      %s74 = ssub.s32 %s28, %s37
      %s75 = ssub.s32 %s26, %s45
      %s76 = sor.u32 %s74, %s75
      %p77 = scmp.eq.s32.totalorder %s76, 0
      %s79 = sadd.s32 %s78, 1
      %s80 = scalar_select %p77, %s78, %s79
      %p83 = pneg %p77
      %p84 = scmp.eq.s32.totalorder %s19, 7
      %p85 = por %p83, %p84
      %p86 = scmp.ne.s32.totalorder %s78, %s81
      %p87 = scmp.eq.s32.totalorder %s19, 0
      %p88 = por %p86, %p87
      %p89 = scmp.ne.s32.totalorder %s78, %s81
      %p90 = scmp.eq.s32.totalorder %s24, 7
      %p91 = por %p89, %p90
      %p92 = scmp.ne.s32.totalorder %s81, %s82
      %p93 = scmp.eq.s32.totalorder %s24, 0
      %p94 = por %p92, %p93
      %p95 = scmp.ne.s32.totalorder %s81, %s82
      %p96 = scmp.eq.s32.totalorder %s25, 7
      %p97 = por %p95, %p96
      %p99 = scmp.ne.s32.totalorder %s82, %s98
      %p100 = scmp.eq.s32.totalorder %s25, 0
      %p101 = por %p99, %p100
      %s102 = ssub.s32 %s28, %s37
      %s103 = ssub.s32 %s26, %s45
      %s104 = sor.u32 %s102, %s103
      %p105 = scmp.eq.s32.totalorder %s104, 0
      %s107 = sadd.s32 %s106, 1
      %s108 = scalar_select %p105, %s106, %s107
      %p111 = pneg %p105
      %p112 = scmp.eq.s32.totalorder %s19, 7
      %p113 = por %p111, %p112
      %p114 = scmp.ne.s32.totalorder %s106, %s109
      %p115 = scmp.eq.s32.totalorder %s19, 0
      %p116 = por %p114, %p115
      %p117 = scmp.ne.s32.totalorder %s106, %s109
      %p118 = scmp.eq.s32.totalorder %s24, 7
      %p119 = por %p117, %p118
      %p120 = scmp.ne.s32.totalorder %s109, %s110
      %p121 = scmp.eq.s32.totalorder %s24, 0
      %p122 = por %p120, %p121
      %p123 = scmp.ne.s32.totalorder %s109, %s110
      %p124 = scmp.eq.s32.totalorder %s25, 7
      %p125 = por %p123, %p124
      %p127 = scmp.ne.s32.totalorder %s110, %s126
      %p128 = scmp.eq.s32.totalorder %s25, 0
      %p129 = por %p127, %p128
      %s130 = ssub.s32 %s26, %s45
      %p131 = scmp.eq.s32.totalorder %s130, 0
      %s133 = sadd.s32 %s132, 1
      %s134 = scalar_select %p131, %s132, %s133
      %p137 = pneg %p131
      %p138 = scmp.eq.s32.totalorder %s19, 7
      %p139 = por %p137, %p138
      %p140 = scmp.ne.s32.totalorder %s132, %s135
      %p141 = scmp.eq.s32.totalorder %s19, 0
      %p142 = por %p140, %p141
      %p143 = scmp.ne.s32.totalorder %s132, %s135
      %p144 = scmp.eq.s32.totalorder %s24, 7
      %p145 = por %p143, %p144
      %p146 = scmp.ne.s32.totalorder %s135, %s136
      %p147 = scmp.eq.s32.totalorder %s24, 0
      %p148 = por %p146, %p147
      %p149 = scmp.ne.s32.totalorder %s135, %s136
      %p150 = scmp.eq.s32.totalorder %s25, 7
      %p151 = por %p149, %p150
      %p153 = scmp.ne.s32.totalorder %s136, %s152
      %p154 = scmp.eq.s32.totalorder %s25, 0
      %p155 = por %p153, %p154
      %s156 = ssub.s32 %s27, %s41
      %s157 = ssub.s32 %s26, %s45
      %s158 = sor.u32 %s156, %s157
      %p159 = scmp.eq.s32.totalorder %s158, 0
      %s161 = sadd.s32 %s160, 1
      %s162 = scalar_select %p159, %s160, %s161
      %p165 = pneg %p159
      %p166 = scmp.eq.s32.totalorder %s19, 7
      %p167 = por %p165, %p166
      %p168 = scmp.ne.s32.totalorder %s160, %s163
      %p169 = scmp.eq.s32.totalorder %s19, 0
      %p170 = por %p168, %p169
      %p171 = scmp.ne.s32.totalorder %s160, %s163
      %p172 = scmp.eq.s32.totalorder %s24, 7
      %p173 = por %p171, %p172
      %p174 = scmp.ne.s32.totalorder %s163, %s164
      %p175 = scmp.eq.s32.totalorder %s24, 0
      %p176 = por %p174, %p175
      %p177 = scmp.ne.s32.totalorder %s163, %s164
      %p178 = scmp.eq.s32.totalorder %s25, 7
      %p179 = por %p177, %p178
      %p181 = scmp.ne.s32.totalorder %s164, %s180
      %p182 = scmp.eq.s32.totalorder %s25, 0
      %p183 = por %p181, %p182
      %p184 = scmp.le.s32.totalorder 1, %s19
      %p185 = scmp.lt.s32.totalorder %s19, 9
      %p186 = pnand %p184, %p185
      %p187 = pneg %p186
      // Predicated region
      $region9: #{tpu_custom_call.1} parent=5 // pred_check
        _
      $region10: #{tpu_custom_call.1} parent=5 // pred_check_branch
        %189 = sbr.rel (%p186) target = $region12
      $region11: #{tpu_custom_call.1} parent=5 // pred_region
        %s190 = ssub.s32 %s19, 1
      $region12: #{tpu_custom_call.1} parent=5 // pred_fallthru
        _
      %p191 = scmp.lt.s32.totalorder %s19, 8
      // Predicated region
      $region13: #{tpu_custom_call.1} parent=5 // pred_check
        %p192 = pneg %p191
      $region14: #{tpu_custom_call.1} parent=5 // pred_check_branch
        %194 = sbr.rel (%p192) target = $region16
      $region15: #{tpu_custom_call.1} parent=5 // pred_region
        // Predicated region
        $region17: #{tpu_custom_call.1} parent=15 // pred_check
          %p195 = pneg %p60
        $region18: #{tpu_custom_call.1} parent=15 // pred_check_branch
          %197 = sbr.rel (%p195) target = $region20
        $region19: #{tpu_custom_call.1} parent=15 // pred_region
          %s198 = sand.u32 %s50, 1
          %s199 = scalar_lea.sflag [#allocation5], %s198
          %s200 = sand.u32 %s50, 1
          %s201 = smul.addr %s200, 16
          %s202 = scalar_lea.vmem [#allocation4], %s201
          %s203 = smul.u32 2, %s27
          %s204 = smul.u32 2, %s28
          %s206 = ssub.s32 256, 256
          %207 = vsyncadd %s199, %s206
          %s208 = smul.addr %s203, 4
          %s209 = sadd.s32 %s204, %s208
          %s210 = smul.addr %s209, 64
          %s211 = scalar_lea.hbm %s0, %s210
          %s212 = sshll.u32 %s202, 4
          %s213 = int_to_ptr.vmem [resolvable:$true] %s212
          %218 = dma.hbm_to_vmem [thread:$0]  %s211, 256, %s213, %s199, 256, 128, 8
        $region20: #{tpu_custom_call.1} parent=15 // pred_fallthru
          _
        // Predicated region
        $region21: #{tpu_custom_call.1} parent=15 // pred_check
          %p219 = pneg %p88
        $region22: #{tpu_custom_call.1} parent=15 // pred_check_branch
          %221 = sbr.rel (%p219) target = $region24
        $region23: #{tpu_custom_call.1} parent=15 // pred_region
          %s222 = sand.u32 %s19, 1
          %s223 = scalar_lea.sflag [#allocation8], %s222
          %s224 = sand.u32 %s78, 1
          %s225 = smul.addr %s224, 64
          %s226 = scalar_lea.vmem [#allocation7], %s225
          %s227 = smul.u32 4, %s28
          %s228 = smul.u32 2, %s26
          %s230 = ssub.s32 1024, 1024
          %231 = vsyncadd %s223, %s230
          %s232 = smul.addr %s227, 4
          %s233 = sadd.s32 %s228, %s232
          %s234 = smul.addr %s233, 128
          %s235 = scalar_lea.hbm %s1, %s234
          %s236 = sshll.u32 %s226, 4
          %s237 = int_to_ptr.vmem [resolvable:$true] %s236
          %242 = dma.hbm_to_vmem [thread:$0]  %s235, 1024, %s237, %s223, 512, 256, 16
        $region24: #{tpu_custom_call.1} parent=15 // pred_fallthru
          _
        // Predicated region
        $region25: #{tpu_custom_call.1} parent=15 // pred_check
          %p243 = pneg %p116
        $region26: #{tpu_custom_call.1} parent=15 // pred_check_branch
          %245 = sbr.rel (%p243) target = $region28
        $region27: #{tpu_custom_call.1} parent=15 // pred_region
          %s246 = sand.u32 %s19, 1
          %s247 = scalar_lea.sflag [#allocation8], %s246
          %s248 = sand.u32 %s106, 1
          %s249 = smul.addr %s248, 16
          %s250 = scalar_lea.vmem [#allocation9], %s249
          %s251 = smul.u32 2, %s26
          %s253 = ssub.s32 256, 256
          %254 = vsyncadd %s247, %s253
          %s255 = smul.addr %s28, 4
          %s256 = sadd.s32 %s251, %s255
          %s257 = smul.addr %s256, 128
          %s258 = scalar_lea.hbm %s2, %s257
          %s260 = sshll.u32 %s250, 4
          %s261 = int_to_ptr.vmem [resolvable:$true] %s260
          %263 = dma.hbm_to_vmem [thread:$0]  %s258, 256, %s261, %s247
        $region28: #{tpu_custom_call.1} parent=15 // pred_fallthru
          _
        // Predicated region
        $region29: #{tpu_custom_call.1} parent=15 // pred_check
          %p264 = pneg %p142
        $region30: #{tpu_custom_call.1} parent=15 // pred_check_branch
          %266 = sbr.rel (%p264) target = $region32
        $region31: #{tpu_custom_call.1} parent=15 // pred_region
          %s267 = smul.u32 2, %s26
          %p268 = scmp.lt.s32.totalorder %s267, 3
          %s269 = scalar_select %p268, %s267, 3
          %s270 = scalar_lea.vmem %s3, %s269
          %s271 = smul.u32 2, %s26
        $region32: #{tpu_custom_call.1} parent=15 // pred_fallthru
          _
      $region16: #{tpu_custom_call.1} parent=5 // pred_fallthru
        _
      %p272 = scmp.le.s32.totalorder 1, %s19
      %p273 = scmp.lt.s32.totalorder %s19, 9
      %p274 = pnand %p272, %p273
      %p275 = pneg %p274
      // Predicated region
      $region33: #{tpu_custom_call.1} parent=5 // pred_check
        _
      $region34: #{tpu_custom_call.1} parent=5 // pred_check_branch
        %277 = sbr.rel (%p274) target = $region36
      $region35: #{tpu_custom_call.1} parent=5 // pred_region
        %s278 = ssub.s32 %s19, 1
        %s279 = sand.u32 %s53, 1
        %s280 = scalar_lea.sflag [#allocation5], %s279
        %s281 = sand.u32 %s53, 1
        %s282 = smul.addr %s281, 16
        %s283 = scalar_lea.vmem [#allocation4], %s282
        // Predicated region
        $region37: #{tpu_custom_call.1} parent=35 // pred_check
          %p284 = pneg %p66
        $region38: #{tpu_custom_call.1} parent=35 // pred_check_branch
          %286 = sbr.rel (%p284) target = $region40
        $region39: #{tpu_custom_call.1} parent=35 // pred_region
          %287 = dma.done %s280, 256
        $region40: #{tpu_custom_call.1} parent=35 // pred_fallthru
          _
        %s288 = sand.u32 %s24, 1
        %s289 = scalar_lea.sflag [#allocation8], %s288
        %s290 = sand.u32 %s81, 1
        %s291 = smul.addr %s290, 64
        %s292 = scalar_lea.vmem [#allocation7], %s291
        // Predicated region
        $region41: #{tpu_custom_call.1} parent=35 // pred_check
          %p293 = pneg %p94
        $region42: #{tpu_custom_call.1} parent=35 // pred_check_branch
          %295 = sbr.rel (%p293) target = $region44
        $region43: #{tpu_custom_call.1} parent=35 // pred_region
          %296 = dma.done %s289, 1024
        $region44: #{tpu_custom_call.1} parent=35 // pred_fallthru
          _
        %s297 = sand.u32 %s24, 1
        %s298 = scalar_lea.sflag [#allocation8], %s297
        %s299 = sand.u32 %s109, 1
        %s300 = smul.addr %s299, 16
        %s301 = scalar_lea.vmem [#allocation9], %s300
        // Predicated region
        $region45: #{tpu_custom_call.1} parent=35 // pred_check
          %p302 = pneg %p122
        $region46: #{tpu_custom_call.1} parent=35 // pred_check_branch
          %304 = sbr.rel (%p302) target = $region48
        $region47: #{tpu_custom_call.1} parent=35 // pred_region
          %305 = dma.done %s298, 256
        $region48: #{tpu_custom_call.1} parent=35 // pred_fallthru
          _
        %s306 = sand.u32 %s53, 1
        %s307 = scalar_lea.sflag [#allocation5], %s306
        %s308 = sand.u32 %s53, 1
        %s309 = smul.addr %s308, 16
        %s310 = scalar_lea.vmem [#allocation4], %s309
        %p311 = pneg %p66
        %p312 = pneg %p63
        %s313 = sand.u32 %s24, 1
        %s314 = scalar_lea.sflag [#allocation8], %s313
        %s315 = sand.u32 %s81, 1
        %s316 = smul.addr %s315, 64
        %s317 = scalar_lea.vmem [#allocation7], %s316
        %p318 = pneg %p94
        %p319 = pneg %p91
        %s320 = sand.u32 %s24, 1
        %s321 = scalar_lea.sflag [#allocation8], %s320
        %s322 = sand.u32 %s109, 1
        %s323 = smul.addr %s322, 16
        %s324 = scalar_lea.vmem [#allocation9], %s323
        %p325 = pneg %p122
        %p326 = pneg %p119
        %s327 = smul.u32 2, %s29
        %p328 = scmp.lt.s32.totalorder %s327, 3
        %s329 = scalar_select %p328, %s327, 3
        %s330 = scalar_lea.vmem %s3, %s329
        %p331 = pneg %p148
        %p332 = pneg %p145
        %p333 = pneg %p176
        %p334 = pneg %p173
        %s335 = sand.u32 %s163, 1
        %s336 = scalar_lea.sflag [#allocation6], %s335
        %s337 = sand.u32 %s163, 1
        %s338 = smul.addr %s337, 32
        %s339 = scalar_lea.vmem [#allocation10], %s338
        %s340 = smul.u32 2, %s30
        %s341 = smul.u32 2, %s31
        %s342 = smul.u32 4, %s31
        %s343 = smul.u32 2, %s29
        %s344 = smul.u32 2, %s29
        %s345 = smul.u32 2, %s29
        %p346 = scmp.lt.s32.totalorder %s345, 3
        %s347 = scalar_select %p346, %s345, 3
        %s348 = scalar_lea.vmem %s3, %s347
        %s349 = smul.u32 2, %s29
        %s350 = smul.u32 2, %s30
        %s351 = smul.u32 2, %s29
        %p352 = scmp.eq.s32.totalorder %s31, 0
        // Predicated region
        $region49: #{tpu_custom_call.1} parent=35 // pred_check
          %p353 = pneg %p352
        $region50: #{tpu_custom_call.1} parent=35 // pred_check_branch
          %355 = sbr.rel (%p353) target = $region52
        $region51: #{tpu_custom_call.1} parent=35 // pred_region
          %356 = vst [vmem:[#allocation2] sm:$0xff] 0.0
          %357 = vst [vmem:[#allocation2 + $0x8] sm:$0xff] 0.0
          %358 = vst [vmem:[#allocation2 + $0x10] sm:$0xff] 0.0
          %359 = vst [vmem:[#allocation2 + $0x18] sm:$0xff] 0.0
        $region52: #{tpu_custom_call.1} parent=35 // pred_fallthru
          _
        %p360 = scmp.eq.s32.totalorder %s30, 0
        // Predicated region
        $region53: #{tpu_custom_call.1} parent=35 // pred_check
          %p361 = pneg %p360
        $region54: #{tpu_custom_call.1} parent=35 // pred_check_branch
          %363 = sbr.rel (%p361) target = $region56
        $region55: #{tpu_custom_call.1} parent=35 // pred_region
          %v364 = vld [vmem:[%s292] sm:$0xff]
          %v365 = vld [vmem:[%s292 + $0x8] sm:$0xff]
          %v366 = vld [vmem:[%s292 + $0x10] sm:$0xff]
          %v367 = vld [vmem:[%s292 + $0x18] sm:$0xff]
          %v368 = vld [vmem:[%s292 + $0x20] sm:$0xff]
          %v369 = vld [vmem:[%s292 + $0x28] sm:$0xff]
          %v370 = vld [vmem:[%s292 + $0x30] sm:$0xff]
          %v371 = vld [vmem:[%s292 + $0x38] sm:$0xff]
          %v372 = vunpack.c.0.s8 %v364
          %v373 = vunpack.c.0.s8 %v365
          %v374 = vunpack.c.1.s8 %v364
          %v375 = vunpack.c.1.s8 %v365
          %v376 = vunpack.c.2.s8 %v364
          %v377 = vunpack.c.2.s8 %v365
          %v378 = vunpack.c.3.s8 %v364
          %v379 = vunpack.c.3.s8 %v365
          %v380 = vunpack.c.0.s8 %v366
          %v381 = vunpack.c.0.s8 %v367
          %v382 = vunpack.c.1.s8 %v366
          %v383 = vunpack.c.1.s8 %v367
          %v384 = vunpack.c.2.s8 %v366
          %v385 = vunpack.c.2.s8 %v367
          %v386 = vunpack.c.3.s8 %v366
          %v387 = vunpack.c.3.s8 %v367
          %v388 = vunpack.c.0.s8 %v368
          %v389 = vunpack.c.0.s8 %v369
          %v390 = vunpack.c.1.s8 %v368
          %v391 = vunpack.c.1.s8 %v369
          %v392 = vunpack.c.2.s8 %v368
          %v393 = vunpack.c.2.s8 %v369
          %v394 = vunpack.c.3.s8 %v368
          %v395 = vunpack.c.3.s8 %v369
          %v396 = vunpack.c.0.s8 %v370
          %v397 = vunpack.c.0.s8 %v371
          %v398 = vunpack.c.1.s8 %v370
          %v399 = vunpack.c.1.s8 %v371
          %v400 = vunpack.c.2.s8 %v370
          %v401 = vunpack.c.2.s8 %v371
          %v402 = vunpack.c.3.s8 %v370
          %v403 = vunpack.c.3.s8 %v371
          %v404 = vand.u32 %v372, 255
          %v405 = vand.u32 %v373, 255
          %v406 = vand.u32 %v374, 255
          %v407 = vand.u32 %v375, 255
          %v408 = vand.u32 %v376, 255
          %v409 = vand.u32 %v377, 255
          %v410 = vand.u32 %v378, 255
          %v411 = vand.u32 %v379, 255
          %v412 = vand.u32 %v380, 255
          %v413 = vand.u32 %v381, 255
          %v414 = vand.u32 %v382, 255
          %v415 = vand.u32 %v383, 255
          %v416 = vand.u32 %v384, 255
          %v417 = vand.u32 %v385, 255
          %v418 = vand.u32 %v386, 255
          %v419 = vand.u32 %v387, 255
          %v420 = vand.u32 %v388, 255
          %v421 = vand.u32 %v389, 255
          %v422 = vand.u32 %v390, 255
          %v423 = vand.u32 %v391, 255
          %v424 = vand.u32 %v392, 255
          %v425 = vand.u32 %v393, 255
          %v426 = vand.u32 %v394, 255
          %v427 = vand.u32 %v395, 255
          %v428 = vand.u32 %v396, 255
          %v429 = vand.u32 %v397, 255
          %v430 = vand.u32 %v398, 255
          %v431 = vand.u32 %v399, 255
          %v432 = vand.u32 %v400, 255
          %v433 = vand.u32 %v401, 255
          %v434 = vand.u32 %v402, 255
          %v435 = vand.u32 %v403, 255
          %v436 = vld [vmem:[%s301] sm:$0xff]
          %v437 = vld [vmem:[%s301 + $0x8] sm:$0xff]
          %v438 = vpack.c.bf16 %v436, %v436
          %v439 = vpack.c.bf16 %v437, %v437
          %v442 = vcombine.low %v438, %v439
          %v444 = vunpack.c.l.s4 1966171168
          %v445 = vunpack.c.0.s8 %v444
          %v446 = vlaneseq
          %v447 = vshrl.u32 %v446, 7
          %v448 = vsub.s32 %v445, %v447
          %v449 = vrot.slane %v442, %v448
          %v450 = vcombine.high %v449, %v449
          %v452 = vunpack.c.l.s4 1966171168
          %v453 = vunpack.c.0.s8 %v452
          %v454 = vlaneseq
          %v455 = vshrl.u32 %v454, 7
          %v456 = vsub.s32 %v453, %v455
          %v457 = vrot.slane %v449, %v456
          %v459 = vunpack.c.l.s4 1966171168
          %v460 = vunpack.c.0.s8 %v459
          %v461 = vlaneseq
          %v462 = vshrl.u32 %v461, 7
          %v463 = vsub.s32 %v460, %v462
          %v464 = vrot.slane %v450, %v463
          %v465 = vcombine.high %v457, %v457
          %v466 = vcombine.high %v464, %v464
          %v467 = vunpack.i.l.s16 %v457
          %v468 = vunpack.i.h.s16 %v457
          %v469 = vunpack.i.l.s16 %v464
          %v470 = vunpack.i.h.s16 %v464
          %v471 = vunpack.i.l.s16 %v465
          %v472 = vunpack.i.h.s16 %v465
          %v473 = vunpack.i.l.s16 %v466
          %v474 = vunpack.i.h.s16 %v466
          %v475 = vand.u32 %v404, 15
          %v476 = vand.u32 %v405, 15
          %v477 = vand.u32 %v406, 15
          %v478 = vand.u32 %v407, 15
          %v479 = vand.u32 %v408, 15
          %v480 = vand.u32 %v409, 15
          %v481 = vand.u32 %v410, 15
          %v482 = vand.u32 %v411, 15
          %v483 = vand.u32 %v412, 15
          %v484 = vand.u32 %v413, 15
          %v485 = vand.u32 %v414, 15
          %v486 = vand.u32 %v415, 15
          %v487 = vand.u32 %v416, 15
          %v488 = vand.u32 %v417, 15
          %v489 = vand.u32 %v418, 15
          %v490 = vand.u32 %v419, 15
          %v491 = vand.u32 %v420, 15
          %v492 = vand.u32 %v421, 15
          %v493 = vand.u32 %v422, 15
          %v494 = vand.u32 %v423, 15
          %v495 = vand.u32 %v424, 15
          %v496 = vand.u32 %v425, 15
          %v497 = vand.u32 %v426, 15
          %v498 = vand.u32 %v427, 15
          %v499 = vand.u32 %v428, 15
          %v500 = vand.u32 %v429, 15
          %v501 = vand.u32 %v430, 15
          %v502 = vand.u32 %v431, 15
          %v503 = vand.u32 %v432, 15
          %v504 = vand.u32 %v433, 15
          %v505 = vand.u32 %v434, 15
          %v506 = vand.u32 %v435, 15
          %v507 = vsub.s32 %v475, 8
          %v508 = vsub.s32 %v476, 8
          %v509 = vsub.s32 %v477, 8
          %v510 = vsub.s32 %v478, 8
          %v511 = vsub.s32 %v479, 8
          %v512 = vsub.s32 %v480, 8
          %v513 = vsub.s32 %v481, 8
          %v514 = vsub.s32 %v482, 8
          %v515 = vsub.s32 %v483, 8
          %v516 = vsub.s32 %v484, 8
          %v517 = vsub.s32 %v485, 8
          %v518 = vsub.s32 %v486, 8
          %v519 = vsub.s32 %v487, 8
          %v520 = vsub.s32 %v488, 8
          %v521 = vsub.s32 %v489, 8
          %v522 = vsub.s32 %v490, 8
          %v523 = vsub.s32 %v491, 8
          %v524 = vsub.s32 %v492, 8
          %v525 = vsub.s32 %v493, 8
          %v526 = vsub.s32 %v494, 8
          %v527 = vsub.s32 %v495, 8
          %v528 = vsub.s32 %v496, 8
          %v529 = vsub.s32 %v497, 8
          %v530 = vsub.s32 %v498, 8
          %v531 = vsub.s32 %v499, 8
          %v532 = vsub.s32 %v500, 8
          %v533 = vsub.s32 %v501, 8
          %v534 = vsub.s32 %v502, 8
          %v535 = vsub.s32 %v503, 8
          %v536 = vsub.s32 %v504, 8
          %v537 = vsub.s32 %v505, 8
          %v538 = vsub.s32 %v506, 8
          %v539 = vcvt.s32.f32 %v507
          %v540 = vcvt.s32.f32 %v508
          %v541 = vcvt.s32.f32 %v509
          %v542 = vcvt.s32.f32 %v510
          %v543 = vcvt.s32.f32 %v511
          %v544 = vcvt.s32.f32 %v512
          %v545 = vcvt.s32.f32 %v513
          %v546 = vcvt.s32.f32 %v514
          %v547 = vcvt.s32.f32 %v515
          %v548 = vcvt.s32.f32 %v516
          %v549 = vcvt.s32.f32 %v517
          %v550 = vcvt.s32.f32 %v518
          %v551 = vcvt.s32.f32 %v519
          %v552 = vcvt.s32.f32 %v520
          %v553 = vcvt.s32.f32 %v521
          %v554 = vcvt.s32.f32 %v522
          %v555 = vcvt.s32.f32 %v523
          %v556 = vcvt.s32.f32 %v524
          %v557 = vcvt.s32.f32 %v525
          %v558 = vcvt.s32.f32 %v526
          %v559 = vcvt.s32.f32 %v527
          %v560 = vcvt.s32.f32 %v528
          %v561 = vcvt.s32.f32 %v529
          %v562 = vcvt.s32.f32 %v530
          %v563 = vcvt.s32.f32 %v531
          %v564 = vcvt.s32.f32 %v532
          %v565 = vcvt.s32.f32 %v533
          %v566 = vcvt.s32.f32 %v534
          %v567 = vcvt.s32.f32 %v535
          %v568 = vcvt.s32.f32 %v536
          %v569 = vcvt.s32.f32 %v537
          %v570 = vcvt.s32.f32 %v538
          %v571 = vpack.c.bf16 %v541, %v539
          %v572 = vpack.c.bf16 %v542, %v540
          %v573 = vpack.c.bf16 %v545, %v543
          %v574 = vpack.c.bf16 %v546, %v544
          %v575 = vpack.c.bf16 %v549, %v547
          %v576 = vpack.c.bf16 %v550, %v548
          %v577 = vpack.c.bf16 %v553, %v551
          %v578 = vpack.c.bf16 %v554, %v552
          %v579 = vpack.c.bf16 %v557, %v555
          %v580 = vpack.c.bf16 %v558, %v556
          %v581 = vpack.c.bf16 %v561, %v559
          %v582 = vpack.c.bf16 %v562, %v560
          %v583 = vpack.c.bf16 %v565, %v563
          %v584 = vpack.c.bf16 %v566, %v564
          %v585 = vpack.c.bf16 %v569, %v567
          %v586 = vpack.c.bf16 %v570, %v568
          %v587 = vshra.s32 %v404, 4
          %v588 = vshra.s32 %v405, 4
          %v589 = vshra.s32 %v406, 4
          %v590 = vshra.s32 %v407, 4
          %v591 = vshra.s32 %v408, 4
          %v592 = vshra.s32 %v409, 4
          %v593 = vshra.s32 %v410, 4
          %v594 = vshra.s32 %v411, 4
          %v595 = vshra.s32 %v412, 4
          %v596 = vshra.s32 %v413, 4
          %v597 = vshra.s32 %v414, 4
          %v598 = vshra.s32 %v415, 4
          %v599 = vshra.s32 %v416, 4
          %v600 = vshra.s32 %v417, 4
          %v601 = vshra.s32 %v418, 4
          %v602 = vshra.s32 %v419, 4
          %v603 = vshra.s32 %v420, 4
          %v604 = vshra.s32 %v421, 4
          %v605 = vshra.s32 %v422, 4
          %v606 = vshra.s32 %v423, 4
          %v607 = vshra.s32 %v424, 4
          %v608 = vshra.s32 %v425, 4
          %v609 = vshra.s32 %v426, 4
          %v610 = vshra.s32 %v427, 4
          %v611 = vshra.s32 %v428, 4
          %v612 = vshra.s32 %v429, 4
          %v613 = vshra.s32 %v430, 4
          %v614 = vshra.s32 %v431, 4
          %v615 = vshra.s32 %v432, 4
          %v616 = vshra.s32 %v433, 4
          %v617 = vshra.s32 %v434, 4
          %v618 = vshra.s32 %v435, 4
          %v619 = vsub.s32 %v587, 8
          %v620 = vsub.s32 %v588, 8
          %v621 = vsub.s32 %v589, 8
          %v622 = vsub.s32 %v590, 8
          %v623 = vsub.s32 %v591, 8
          %v624 = vsub.s32 %v592, 8
          %v625 = vsub.s32 %v593, 8
          %v626 = vsub.s32 %v594, 8
          %v627 = vsub.s32 %v595, 8
          %v628 = vsub.s32 %v596, 8
          %v629 = vsub.s32 %v597, 8
          %v630 = vsub.s32 %v598, 8
          %v631 = vsub.s32 %v599, 8
          %v632 = vsub.s32 %v600, 8
          %v633 = vsub.s32 %v601, 8
          %v634 = vsub.s32 %v602, 8
          %v635 = vsub.s32 %v603, 8
          %v636 = vsub.s32 %v604, 8
          %v637 = vsub.s32 %v605, 8
          %v638 = vsub.s32 %v606, 8
          %v639 = vsub.s32 %v607, 8
          %v640 = vsub.s32 %v608, 8
          %v641 = vsub.s32 %v609, 8
          %v642 = vsub.s32 %v610, 8
          %v643 = vsub.s32 %v611, 8
          %v644 = vsub.s32 %v612, 8
          %v645 = vsub.s32 %v613, 8
          %v646 = vsub.s32 %v614, 8
          %v647 = vsub.s32 %v615, 8
          %v648 = vsub.s32 %v616, 8
          %v649 = vsub.s32 %v617, 8
          %v650 = vsub.s32 %v618, 8
          %v651 = vcvt.s32.f32 %v619
          %v652 = vcvt.s32.f32 %v620
          %v653 = vcvt.s32.f32 %v621
          %v654 = vcvt.s32.f32 %v622
          %v655 = vcvt.s32.f32 %v623
          %v656 = vcvt.s32.f32 %v624
          %v657 = vcvt.s32.f32 %v625
          %v658 = vcvt.s32.f32 %v626
          %v659 = vcvt.s32.f32 %v627
          %v660 = vcvt.s32.f32 %v628
          %v661 = vcvt.s32.f32 %v629
          %v662 = vcvt.s32.f32 %v630
          %v663 = vcvt.s32.f32 %v631
          %v664 = vcvt.s32.f32 %v632
          %v665 = vcvt.s32.f32 %v633
          %v666 = vcvt.s32.f32 %v634
          %v667 = vcvt.s32.f32 %v635
          %v668 = vcvt.s32.f32 %v636
          %v669 = vcvt.s32.f32 %v637
          %v670 = vcvt.s32.f32 %v638
          %v671 = vcvt.s32.f32 %v639
          %v672 = vcvt.s32.f32 %v640
          %v673 = vcvt.s32.f32 %v641
          %v674 = vcvt.s32.f32 %v642
          %v675 = vcvt.s32.f32 %v643
          %v676 = vcvt.s32.f32 %v644
          %v677 = vcvt.s32.f32 %v645
          %v678 = vcvt.s32.f32 %v646
          %v679 = vcvt.s32.f32 %v647
          %v680 = vcvt.s32.f32 %v648
          %v681 = vcvt.s32.f32 %v649
          %v682 = vcvt.s32.f32 %v650
          %v683 = vpack.c.bf16 %v653, %v651
          %v684 = vpack.c.bf16 %v654, %v652
          %v685 = vpack.c.bf16 %v657, %v655
          %v686 = vpack.c.bf16 %v658, %v656
          %v687 = vpack.c.bf16 %v661, %v659
          %v688 = vpack.c.bf16 %v662, %v660
          %v689 = vpack.c.bf16 %v665, %v663
          %v690 = vpack.c.bf16 %v666, %v664
          %v691 = vpack.c.bf16 %v669, %v667
          %v692 = vpack.c.bf16 %v670, %v668
          %v693 = vpack.c.bf16 %v673, %v671
          %v694 = vpack.c.bf16 %v674, %v672
          %v695 = vpack.c.bf16 %v677, %v675
          %v696 = vpack.c.bf16 %v678, %v676
          %v697 = vpack.c.bf16 %v681, %v679
          %v698 = vpack.c.bf16 %v682, %v680
          %v699 = vpack.i.b16 %v467, %v467
          %v700 = vpack.i.b16 %v468, %v468
          %v701 = vpack.i.b16 %v469, %v469
          %v702 = vpack.i.b16 %v470, %v470
          %v703 = vpack.i.b16 %v471, %v471
          %v704 = vpack.i.b16 %v472, %v472
          %v705 = vpack.i.b16 %v473, %v473
          %v706 = vpack.i.b16 %v474, %v474
          %v707 = vlaneseq
          %v708 = vshrl.u32 %v707, 7
          %v709 = vsub.s32 0, %v708
          %v710 = vrot.slane %v699, %v709
          %v711 = vlaneseq
          %v712 = vshrl.u32 %v711, 7
          %v713 = vsub.s32 1, %v712
          %v714 = vrot.slane %v699, %v713
          %v715 = vlaneseq
          %v716 = vshrl.u32 %v715, 7
          %v717 = vsub.s32 0, %v716
          %v718 = vrot.slane %v700, %v717
          %v719 = vlaneseq
          %v720 = vshrl.u32 %v719, 7
          %v721 = vsub.s32 1, %v720
          %v722 = vrot.slane %v700, %v721
          %v723 = vlaneseq
          %v724 = vshrl.u32 %v723, 7
          %v725 = vsub.s32 0, %v724
          %v726 = vrot.slane %v701, %v725
          %v727 = vlaneseq
          %v728 = vshrl.u32 %v727, 7
          %v729 = vsub.s32 1, %v728
          %v730 = vrot.slane %v701, %v729
          %v731 = vlaneseq
          %v732 = vshrl.u32 %v731, 7
          %v733 = vsub.s32 0, %v732
          %v734 = vrot.slane %v702, %v733
          %v735 = vlaneseq
          %v736 = vshrl.u32 %v735, 7
          %v737 = vsub.s32 1, %v736
          %v738 = vrot.slane %v702, %v737
          %v739 = vlaneseq
          %v740 = vshrl.u32 %v739, 7
          %v741 = vsub.s32 0, %v740
          %v742 = vrot.slane %v703, %v741
          %v743 = vlaneseq
          %v744 = vshrl.u32 %v743, 7
          %v745 = vsub.s32 1, %v744
          %v746 = vrot.slane %v703, %v745
          %v747 = vlaneseq
          %v748 = vshrl.u32 %v747, 7
          %v749 = vsub.s32 0, %v748
          %v750 = vrot.slane %v704, %v749
          %v751 = vlaneseq
          %v752 = vshrl.u32 %v751, 7
          %v753 = vsub.s32 1, %v752
          %v754 = vrot.slane %v704, %v753
          %v755 = vlaneseq
          %v756 = vshrl.u32 %v755, 7
          %v757 = vsub.s32 0, %v756
          %v758 = vrot.slane %v705, %v757
          %v759 = vlaneseq
          %v760 = vshrl.u32 %v759, 7
          %v761 = vsub.s32 1, %v760
          %v762 = vrot.slane %v705, %v761
          %v763 = vlaneseq
          %v764 = vshrl.u32 %v763, 7
          %v765 = vsub.s32 0, %v764
          %v766 = vrot.slane %v706, %v765
          %v767 = vlaneseq
          %v768 = vshrl.u32 %v767, 7
          %v769 = vsub.s32 1, %v768
          %v770 = vrot.slane %v706, %v769
          %v772 = vpack.i.b16 %v710, %v710
          %v774 = vlaneseq
          %v775 = vshrl.u32 %v774, 7
          %v776 = vsub.s32 0, %v775
          %v777 = vrot.slane %v772, %v776
          %v779 = vpack.i.b16 %v714, %v714
          %v781 = vlaneseq
          %v782 = vshrl.u32 %v781, 7
          %v783 = vsub.s32 0, %v782
          %v784 = vrot.slane %v779, %v783
          %v786 = vpack.i.b16 %v718, %v718
          %v788 = vlaneseq
          %v789 = vshrl.u32 %v788, 7
          %v790 = vsub.s32 0, %v789
          %v791 = vrot.slane %v786, %v790
          %v793 = vpack.i.b16 %v722, %v722
          %v795 = vlaneseq
          %v796 = vshrl.u32 %v795, 7
          %v797 = vsub.s32 0, %v796
          %v798 = vrot.slane %v793, %v797
          %v800 = vpack.i.b16 %v726, %v726
          %v802 = vlaneseq
          %v803 = vshrl.u32 %v802, 7
          %v804 = vsub.s32 0, %v803
          %v805 = vrot.slane %v800, %v804
          %v807 = vpack.i.b16 %v730, %v730
          %v809 = vlaneseq
          %v810 = vshrl.u32 %v809, 7
          %v811 = vsub.s32 0, %v810
          %v812 = vrot.slane %v807, %v811
          %v814 = vpack.i.b16 %v734, %v734
          %v816 = vlaneseq
          %v817 = vshrl.u32 %v816, 7
          %v818 = vsub.s32 0, %v817
          %v819 = vrot.slane %v814, %v818
          %v821 = vpack.i.b16 %v738, %v738
          %v823 = vlaneseq
          %v824 = vshrl.u32 %v823, 7
          %v825 = vsub.s32 0, %v824
          %v826 = vrot.slane %v821, %v825
          %v828 = vpack.i.b16 %v742, %v742
          %v830 = vlaneseq
          %v831 = vshrl.u32 %v830, 7
          %v832 = vsub.s32 0, %v831
          %v833 = vrot.slane %v828, %v832
          %v835 = vpack.i.b16 %v746, %v746
          %v837 = vlaneseq
          %v838 = vshrl.u32 %v837, 7
          %v839 = vsub.s32 0, %v838
          %v840 = vrot.slane %v835, %v839
          %v842 = vpack.i.b16 %v750, %v750
          %v844 = vlaneseq
          %v845 = vshrl.u32 %v844, 7
          %v846 = vsub.s32 0, %v845
          %v847 = vrot.slane %v842, %v846
          %v849 = vpack.i.b16 %v754, %v754
          %v851 = vlaneseq
          %v852 = vshrl.u32 %v851, 7
          %v853 = vsub.s32 0, %v852
          %v854 = vrot.slane %v849, %v853
          %v856 = vpack.i.b16 %v758, %v758
          %v858 = vlaneseq
          %v859 = vshrl.u32 %v858, 7
          %v860 = vsub.s32 0, %v859
          %v861 = vrot.slane %v856, %v860
          %v863 = vpack.i.b16 %v762, %v762
          %v865 = vlaneseq
          %v866 = vshrl.u32 %v865, 7
          %v867 = vsub.s32 0, %v866
          %v868 = vrot.slane %v863, %v867
          %v870 = vpack.i.b16 %v766, %v766
          %v872 = vlaneseq
          %v873 = vshrl.u32 %v872, 7
          %v874 = vsub.s32 0, %v873
          %v875 = vrot.slane %v870, %v874
          %v877 = vpack.i.b16 %v770, %v770
          %v879 = vlaneseq
          %v880 = vshrl.u32 %v879, 7
          %v881 = vsub.s32 0, %v880
          %v882 = vrot.slane %v877, %v881
          %v883 = vmul.bf16 %v571, %v777
          %v884 = vmul.bf16 %v572, %v784
          %v885 = vmul.bf16 %v573, %v791
          %v886 = vmul.bf16 %v574, %v798
          %v887 = vmul.bf16 %v575, %v805
          %v888 = vmul.bf16 %v576, %v812
          %v889 = vmul.bf16 %v577, %v819
          %v890 = vmul.bf16 %v578, %v826
          %v891 = vmul.bf16 %v579, %v833
          %v892 = vmul.bf16 %v580, %v840
          %v893 = vmul.bf16 %v581, %v847
          %v894 = vmul.bf16 %v582, %v854
          %v895 = vmul.bf16 %v583, %v861
          %v896 = vmul.bf16 %v584, %v868
          %v897 = vmul.bf16 %v585, %v875
          %v898 = vmul.bf16 %v586, %v882
          %v899 = vmul.bf16 %v683, %v777
          %v900 = vmul.bf16 %v684, %v784
          %v901 = vmul.bf16 %v685, %v791
          %v902 = vmul.bf16 %v686, %v798
          %v903 = vmul.bf16 %v687, %v805
          %v904 = vmul.bf16 %v688, %v812
          %v905 = vmul.bf16 %v689, %v819
          %v906 = vmul.bf16 %v690, %v826
          %v907 = vmul.bf16 %v691, %v833
          %v908 = vmul.bf16 %v692, %v840
          %v909 = vmul.bf16 %v693, %v847
          %v910 = vmul.bf16 %v694, %v854
          %v911 = vmul.bf16 %v695, %v861
          %v912 = vmul.bf16 %v696, %v868
          %v913 = vmul.bf16 %v697, %v875
          %v914 = vmul.bf16 %v698, %v882
          %v931 = vunpack.c.l.b16 %v883
          %v932 = vunpack.c.l.b16 %v884
          %v933 = vunpack.c.h.b16 %v883
          %v934 = vunpack.c.h.b16 %v884
          %v935 = vunpack.c.l.b16 %v885
          %v936 = vunpack.c.l.b16 %v886
          %v937 = vunpack.c.h.b16 %v885
          %v938 = vunpack.c.h.b16 %v886
          %v939 = vunpack.c.l.b16 %v887
          %v940 = vunpack.c.l.b16 %v888
          %v941 = vunpack.c.h.b16 %v887
          %v942 = vunpack.c.h.b16 %v888
          %v943 = vunpack.c.l.b16 %v889
          %v944 = vunpack.c.l.b16 %v890
          %v945 = vunpack.c.h.b16 %v889
          %v946 = vunpack.c.h.b16 %v890
          %v947 = vunpack.c.l.b16 %v891
          %v948 = vunpack.c.l.b16 %v892
          %v949 = vunpack.c.h.b16 %v891
          %v950 = vunpack.c.h.b16 %v892
          %v951 = vunpack.c.l.b16 %v893
          %v952 = vunpack.c.l.b16 %v894
          %v953 = vunpack.c.h.b16 %v893
          %v954 = vunpack.c.h.b16 %v894
          %v955 = vunpack.c.l.b16 %v895
          %v956 = vunpack.c.l.b16 %v896
          %v957 = vunpack.c.h.b16 %v895
          %v958 = vunpack.c.h.b16 %v896
          %v959 = vunpack.c.l.b16 %v897
          %v960 = vunpack.c.l.b16 %v898
          %v961 = vunpack.c.h.b16 %v897
          %v962 = vunpack.c.h.b16 %v898
          %v963 = vpack.c.b16 %v932, %v931
          %v964 = vpack.c.b16 %v934, %v933
          %v965 = vpack.c.b16 %v936, %v935
          %v966 = vpack.c.b16 %v938, %v937
          %v967 = vpack.c.b16 %v940, %v939
          %v968 = vpack.c.b16 %v942, %v941
          %v969 = vpack.c.b16 %v944, %v943
          %v970 = vpack.c.b16 %v946, %v945
          %v971 = vpack.c.b16 %v948, %v947
          %v972 = vpack.c.b16 %v950, %v949
          %v973 = vpack.c.b16 %v952, %v951
          %v974 = vpack.c.b16 %v954, %v953
          %v975 = vpack.c.b16 %v956, %v955
          %v976 = vpack.c.b16 %v958, %v957
          %v977 = vpack.c.b16 %v960, %v959
          %v978 = vpack.c.b16 %v962, %v961
          %s995 = smul.u32 %s31, 64
          %s996 = smul.addr %s995, 4
          %s997 = scalar_lea.vmem [#allocation3], %s996
          %998 = vst [vmem:[%s997] sm:$0xff] %v963
          %999 = vst [vmem:[%s997 + $0x8] sm:$0xff] %v964
          %1000 = vst [vmem:[%s997 + $0x10] sm:$0xff] %v965
          %1001 = vst [vmem:[%s997 + $0x18] sm:$0xff] %v966
          %1002 = vst [vmem:[%s997 + $0x20] sm:$0xff] %v967
          %1003 = vst [vmem:[%s997 + $0x28] sm:$0xff] %v968
          %1004 = vst [vmem:[%s997 + $0x30] sm:$0xff] %v969
          %1005 = vst [vmem:[%s997 + $0x38] sm:$0xff] %v970
          %1006 = vst [vmem:[%s997 + $0x40] sm:$0xff] %v971
          %1007 = vst [vmem:[%s997 + $0x48] sm:$0xff] %v972
          %1008 = vst [vmem:[%s997 + $0x50] sm:$0xff] %v973
          %1009 = vst [vmem:[%s997 + $0x58] sm:$0xff] %v974
          %1010 = vst [vmem:[%s997 + $0x60] sm:$0xff] %v975
          %1011 = vst [vmem:[%s997 + $0x68] sm:$0xff] %v976
          %1012 = vst [vmem:[%s997 + $0x70] sm:$0xff] %v977
          %1013 = vst [vmem:[%s997 + $0x78] sm:$0xff] %v978
          %v1030 = vunpack.c.l.b16 %v899
          %v1031 = vunpack.c.l.b16 %v900
          %v1032 = vunpack.c.h.b16 %v899
          %v1033 = vunpack.c.h.b16 %v900
          %v1034 = vunpack.c.l.b16 %v901
          %v1035 = vunpack.c.l.b16 %v902
          %v1036 = vunpack.c.h.b16 %v901
          %v1037 = vunpack.c.h.b16 %v902
          %v1038 = vunpack.c.l.b16 %v903
          %v1039 = vunpack.c.l.b16 %v904
          %v1040 = vunpack.c.h.b16 %v903
          %v1041 = vunpack.c.h.b16 %v904
          %v1042 = vunpack.c.l.b16 %v905
          %v1043 = vunpack.c.l.b16 %v906
          %v1044 = vunpack.c.h.b16 %v905
          %v1045 = vunpack.c.h.b16 %v906
          %v1046 = vunpack.c.l.b16 %v907
          %v1047 = vunpack.c.l.b16 %v908
          %v1048 = vunpack.c.h.b16 %v907
          %v1049 = vunpack.c.h.b16 %v908
          %v1050 = vunpack.c.l.b16 %v909
          %v1051 = vunpack.c.l.b16 %v910
          %v1052 = vunpack.c.h.b16 %v909
          %v1053 = vunpack.c.h.b16 %v910
          %v1054 = vunpack.c.l.b16 %v911
          %v1055 = vunpack.c.l.b16 %v912
          %v1056 = vunpack.c.h.b16 %v911
          %v1057 = vunpack.c.h.b16 %v912
          %v1058 = vunpack.c.l.b16 %v913
          %v1059 = vunpack.c.l.b16 %v914
          %v1060 = vunpack.c.h.b16 %v913
          %v1061 = vunpack.c.h.b16 %v914
          %v1062 = vpack.c.b16 %v1031, %v1030
          %v1063 = vpack.c.b16 %v1033, %v1032
          %v1064 = vpack.c.b16 %v1035, %v1034
          %v1065 = vpack.c.b16 %v1037, %v1036
          %v1066 = vpack.c.b16 %v1039, %v1038
          %v1067 = vpack.c.b16 %v1041, %v1040
          %v1068 = vpack.c.b16 %v1043, %v1042
          %v1069 = vpack.c.b16 %v1045, %v1044
          %v1070 = vpack.c.b16 %v1047, %v1046
          %v1071 = vpack.c.b16 %v1049, %v1048
          %v1072 = vpack.c.b16 %v1051, %v1050
          %v1073 = vpack.c.b16 %v1053, %v1052
          %v1074 = vpack.c.b16 %v1055, %v1054
          %v1075 = vpack.c.b16 %v1057, %v1056
          %v1076 = vpack.c.b16 %v1059, %v1058
          %v1077 = vpack.c.b16 %v1061, %v1060
          %1094 = vst [vmem:[%s997 + $0x80] sm:$0xff] %v1062
          %1095 = vst [vmem:[%s997 + $0x88] sm:$0xff] %v1063
          %1096 = vst [vmem:[%s997 + $0x90] sm:$0xff] %v1064
          %1097 = vst [vmem:[%s997 + $0x98] sm:$0xff] %v1065
          %1098 = vst [vmem:[%s997 + $0xa0] sm:$0xff] %v1066
          %1099 = vst [vmem:[%s997 + $0xa8] sm:$0xff] %v1067
          %1100 = vst [vmem:[%s997 + $0xb0] sm:$0xff] %v1068
          %1101 = vst [vmem:[%s997 + $0xb8] sm:$0xff] %v1069
          %1102 = vst [vmem:[%s997 + $0xc0] sm:$0xff] %v1070
          %1103 = vst [vmem:[%s997 + $0xc8] sm:$0xff] %v1071
          %1104 = vst [vmem:[%s997 + $0xd0] sm:$0xff] %v1072
          %1105 = vst [vmem:[%s997 + $0xd8] sm:$0xff] %v1073
          %1106 = vst [vmem:[%s997 + $0xe0] sm:$0xff] %v1074
          %1107 = vst [vmem:[%s997 + $0xe8] sm:$0xff] %v1075
          %1108 = vst [vmem:[%s997 + $0xf0] sm:$0xff] %v1076
          %1109 = vst [vmem:[%s997 + $0xf8] sm:$0xff] %v1077
        $region56: #{tpu_custom_call.1} parent=35 // pred_fallthru
          _
        %v1110 = vld [vmem:[#allocation2] sm:$0xff]
        %v1111 = vld [vmem:[#allocation2 + $0x8] sm:$0xff]
        %v1112 = vld [vmem:[#allocation2 + $0x10] sm:$0xff]
        %v1113 = vld [vmem:[#allocation2 + $0x18] sm:$0xff]
        %v1114 = vld [vmem:[%s283] sm:$0xff]
        %v1115 = vld [vmem:[%s283 + $0x8] sm:$0xff]
        %s1116 = smul.u32 %s31, 64
        %s1117 = smul.addr %s1116, 4
        %s1118 = scalar_lea.vmem [#allocation3], %s1117
        %v1119 = vld [vmem:[%s1118] sm:$0xff]
        %v1120 = vld [vmem:[%s1118 + $0x8] sm:$0xff]
        %v1121 = vld [vmem:[%s1118 + $0x10] sm:$0xff]
        %v1122 = vld [vmem:[%s1118 + $0x18] sm:$0xff]
        %v1123 = vld [vmem:[%s1118 + $0x20] sm:$0xff]
        %v1124 = vld [vmem:[%s1118 + $0x28] sm:$0xff]
        %v1125 = vld [vmem:[%s1118 + $0x30] sm:$0xff]
        %v1126 = vld [vmem:[%s1118 + $0x38] sm:$0xff]
        %v1127 = vld [vmem:[%s1118 + $0x40] sm:$0xff]
        %v1128 = vld [vmem:[%s1118 + $0x48] sm:$0xff]
        %v1129 = vld [vmem:[%s1118 + $0x50] sm:$0xff]
        %v1130 = vld [vmem:[%s1118 + $0x58] sm:$0xff]
        %v1131 = vld [vmem:[%s1118 + $0x60] sm:$0xff]
        %v1132 = vld [vmem:[%s1118 + $0x68] sm:$0xff]
        %v1133 = vld [vmem:[%s1118 + $0x70] sm:$0xff]
        %v1134 = vld [vmem:[%s1118 + $0x78] sm:$0xff]
        %v1135 = vld [vmem:[%s1118 + $0x80] sm:$0xff]
        %v1136 = vld [vmem:[%s1118 + $0x88] sm:$0xff]
        %v1137 = vld [vmem:[%s1118 + $0x90] sm:$0xff]
        %v1138 = vld [vmem:[%s1118 + $0x98] sm:$0xff]
        %v1139 = vld [vmem:[%s1118 + $0xa0] sm:$0xff]
        %v1140 = vld [vmem:[%s1118 + $0xa8] sm:$0xff]
        %v1141 = vld [vmem:[%s1118 + $0xb0] sm:$0xff]
        %v1142 = vld [vmem:[%s1118 + $0xb8] sm:$0xff]
        %v1143 = vld [vmem:[%s1118 + $0xc0] sm:$0xff]
        %v1144 = vld [vmem:[%s1118 + $0xc8] sm:$0xff]
        %v1145 = vld [vmem:[%s1118 + $0xd0] sm:$0xff]
        %v1146 = vld [vmem:[%s1118 + $0xd8] sm:$0xff]
        %v1147 = vld [vmem:[%s1118 + $0xe0] sm:$0xff]
        %v1148 = vld [vmem:[%s1118 + $0xe8] sm:$0xff]
        %v1149 = vld [vmem:[%s1118 + $0xf0] sm:$0xff]
        %v1150 = vld [vmem:[%s1118 + $0xf8] sm:$0xff]
        %v1153 = vunpack.c.l.b16 %v1114
        %v1154 = vunpack.c.h.b16 %v1114
        %v1155 = vunpack.c.l.b16 %v1115
        %v1156 = vunpack.c.h.b16 %v1115
        %v1157 = vpack.c.b16 %v1155, %v1153
        %v1158 = vpack.c.b16 %v1156, %v1154
        %v1193 = vunpack.c.l.b16 %v1119
        %v1194 = vunpack.c.h.b16 %v1119
        %v1195 = vunpack.c.l.b16 %v1120
        %v1196 = vunpack.c.h.b16 %v1120
        %v1197 = vunpack.c.l.b16 %v1121
        %v1198 = vunpack.c.h.b16 %v1121
        %v1199 = vunpack.c.l.b16 %v1122
        %v1200 = vunpack.c.h.b16 %v1122
        %v1201 = vunpack.c.l.b16 %v1123
        %v1202 = vunpack.c.h.b16 %v1123
        %v1203 = vunpack.c.l.b16 %v1124
        %v1204 = vunpack.c.h.b16 %v1124
        %v1205 = vunpack.c.l.b16 %v1125
        %v1206 = vunpack.c.h.b16 %v1125
        %v1207 = vunpack.c.l.b16 %v1126
        %v1208 = vunpack.c.h.b16 %v1126
        %v1209 = vunpack.c.l.b16 %v1127
        %v1210 = vunpack.c.h.b16 %v1127
        %v1211 = vunpack.c.l.b16 %v1128
        %v1212 = vunpack.c.h.b16 %v1128
        %v1213 = vunpack.c.l.b16 %v1129
        %v1214 = vunpack.c.h.b16 %v1129
        %v1215 = vunpack.c.l.b16 %v1130
        %v1216 = vunpack.c.h.b16 %v1130
        %v1217 = vunpack.c.l.b16 %v1131
        %v1218 = vunpack.c.h.b16 %v1131
        %v1219 = vunpack.c.l.b16 %v1132
        %v1220 = vunpack.c.h.b16 %v1132
        %v1221 = vunpack.c.l.b16 %v1133
        %v1222 = vunpack.c.h.b16 %v1133
        %v1223 = vunpack.c.l.b16 %v1134
        %v1224 = vunpack.c.h.b16 %v1134
        %v1225 = vunpack.c.l.b16 %v1135
        %v1226 = vunpack.c.h.b16 %v1135
        %v1227 = vunpack.c.l.b16 %v1136
        %v1228 = vunpack.c.h.b16 %v1136
        %v1229 = vunpack.c.l.b16 %v1137
        %v1230 = vunpack.c.h.b16 %v1137
        %v1231 = vunpack.c.l.b16 %v1138
        %v1232 = vunpack.c.h.b16 %v1138
        %v1233 = vunpack.c.l.b16 %v1139
        %v1234 = vunpack.c.h.b16 %v1139
        %v1235 = vunpack.c.l.b16 %v1140
        %v1236 = vunpack.c.h.b16 %v1140
        %v1237 = vunpack.c.l.b16 %v1141
        %v1238 = vunpack.c.h.b16 %v1141
        %v1239 = vunpack.c.l.b16 %v1142
        %v1240 = vunpack.c.h.b16 %v1142
        %v1241 = vunpack.c.l.b16 %v1143
        %v1242 = vunpack.c.h.b16 %v1143
        %v1243 = vunpack.c.l.b16 %v1144
        %v1244 = vunpack.c.h.b16 %v1144
        %v1245 = vunpack.c.l.b16 %v1145
        %v1246 = vunpack.c.h.b16 %v1145
        %v1247 = vunpack.c.l.b16 %v1146
        %v1248 = vunpack.c.h.b16 %v1146
        %v1249 = vunpack.c.l.b16 %v1147
        %v1250 = vunpack.c.h.b16 %v1147
        %v1251 = vunpack.c.l.b16 %v1148
        %v1252 = vunpack.c.h.b16 %v1148
        %v1253 = vunpack.c.l.b16 %v1149
        %v1254 = vunpack.c.h.b16 %v1149
        %v1255 = vunpack.c.l.b16 %v1150
        %v1256 = vunpack.c.h.b16 %v1150
        %v1257 = vpack.c.b16 %v1195, %v1193
        %v1258 = vpack.c.b16 %v1196, %v1194
        %v1259 = vpack.c.b16 %v1199, %v1197
        %v1260 = vpack.c.b16 %v1200, %v1198
        %v1261 = vpack.c.b16 %v1203, %v1201
        %v1262 = vpack.c.b16 %v1204, %v1202
        %v1263 = vpack.c.b16 %v1207, %v1205
        %v1264 = vpack.c.b16 %v1208, %v1206
        %v1265 = vpack.c.b16 %v1211, %v1209
        %v1266 = vpack.c.b16 %v1212, %v1210
        %v1267 = vpack.c.b16 %v1215, %v1213
        %v1268 = vpack.c.b16 %v1216, %v1214
        %v1269 = vpack.c.b16 %v1219, %v1217
        %v1270 = vpack.c.b16 %v1220, %v1218
        %v1271 = vpack.c.b16 %v1223, %v1221
        %v1272 = vpack.c.b16 %v1224, %v1222
        %v1273 = vpack.c.b16 %v1227, %v1225
        %v1274 = vpack.c.b16 %v1228, %v1226
        %v1275 = vpack.c.b16 %v1231, %v1229
        %v1276 = vpack.c.b16 %v1232, %v1230
        %v1277 = vpack.c.b16 %v1235, %v1233
        %v1278 = vpack.c.b16 %v1236, %v1234
        %v1279 = vpack.c.b16 %v1239, %v1237
        %v1280 = vpack.c.b16 %v1240, %v1238
        %v1281 = vpack.c.b16 %v1243, %v1241
        %v1282 = vpack.c.b16 %v1244, %v1242
        %v1283 = vpack.c.b16 %v1247, %v1245
        %v1284 = vpack.c.b16 %v1248, %v1246
        %v1285 = vpack.c.b16 %v1251, %v1249
        %v1286 = vpack.c.b16 %v1252, %v1250
        %v1287 = vpack.c.b16 %v1255, %v1253
        %v1288 = vpack.c.b16 %v1256, %v1254
        %1321 = vmatprep.subr.bf16.mxu0 %v1272
        %1322 = vmatpush1.bf16.msra.mxu0 %v1271
        %1323 = vmatprep.subr.bf16.mxu0 %v1270
        %1324 = vmatpush1.bf16.msra.mxu0 %v1269
        %1325 = vmatprep.subr.bf16.mxu0 %v1268
        %1326 = vmatpush1.bf16.msra.mxu0 %v1267
        %1327 = vmatprep.subr.bf16.mxu0 %v1266
        %1328 = vmatpush1.bf16.msra.mxu0 %v1265
        %1329 = vmatprep.subr.bf16.mxu0 %v1264
        %1330 = vmatpush1.bf16.msra.mxu0 %v1263
        %1331 = vmatprep.subr.bf16.mxu0 %v1262
        %1332 = vmatpush1.bf16.msra.mxu0 %v1261
        %1333 = vmatprep.subr.bf16.mxu0 %v1260
        %1334 = vmatpush1.bf16.msra.mxu0 %v1259
        %1335 = vmatprep.subr.bf16.mxu0 %v1258
        %1336 = vmatpush1.bf16.msra.mxu0 %v1257
        %1337 = vmatprep.subr.bf16.mxu0 %v1288
        %1338 = vmatpush2.bf16.msra.mxu0 %v1287
        %1339 = vmatprep.subr.bf16.mxu0 %v1286
        %1340 = vmatpush2.bf16.msra.mxu0 %v1285
        %1341 = vmatprep.subr.bf16.mxu0 %v1284
        %1342 = vmatpush2.bf16.msra.mxu0 %v1283
        %1343 = vmatprep.subr.bf16.mxu0 %v1282
        %1344 = vmatpush2.bf16.msra.mxu0 %v1281
        %1345 = vmatprep.subr.bf16.mxu0 %v1280
        %1346 = vmatpush2.bf16.msra.mxu0 %v1279
        %1347 = vmatprep.subr.bf16.mxu0 %v1278
        %1348 = vmatpush2.bf16.msra.mxu0 %v1277
        %1349 = vmatprep.subr.bf16.mxu0 %v1276
        %1350 = vmatpush2.bf16.msra.mxu0 %v1275
        %1351 = vmatprep.subr.bf16.mxu0 %v1274
        %1352 = vmatpush2.bf16.msra.mxu0 %v1273
        %1353 = vmatprep.mubr.bf16.mxu0 %v1158
        %1354 = vmatmul.mubr.bf16.gmra.mxu0 %v1157
        %v1355 = vpop.f32.mrf.mxu0
        %v1356 = vadd.f32 0.0, %v1355
        %v1357 = vpop.f32.mrf.mxu0
        %v1358 = vadd.f32 0.0, %v1357
        %v1359 = vpop.f32.mrf.mxu0
        %v1360 = vadd.f32 0.0, %v1359
        %v1361 = vpop.f32.mrf.mxu0
        %v1362 = vadd.f32 0.0, %v1361
        %1363 = vdwg.mxu0
        %v1364 = vadd.f32 %v1110, %v1356
        %v1365 = vadd.f32 %v1111, %v1358
        %v1366 = vadd.f32 %v1112, %v1360
        %v1367 = vadd.f32 %v1113, %v1362
        %1368 = vst [vmem:[#allocation2] sm:$0xff] %v1364
        %1369 = vst [vmem:[#allocation2 + $0x8] sm:$0xff] %v1365
        %1370 = vst [vmem:[#allocation2 + $0x10] sm:$0xff] %v1366
        %1371 = vst [vmem:[#allocation2 + $0x18] sm:$0xff] %v1367
        %p1372 = scmp.eq.s32.totalorder %s31, 1
        // Predicated region
        $region57: #{tpu_custom_call.1} parent=35 // pred_check
          %p1373 = pneg %p1372
        $region58: #{tpu_custom_call.1} parent=35 // pred_check_branch
          %1375 = sbr.rel (%p1373) target = $region60
        $region59: #{tpu_custom_call.1} parent=35 // pred_region
          %v1376 = vld [vmem:[#allocation2] sm:$0xff]
          %v1377 = vld [vmem:[#allocation2 + $0x8] sm:$0xff]
          %v1378 = vld [vmem:[#allocation2 + $0x10] sm:$0xff]
          %v1379 = vld [vmem:[#allocation2 + $0x18] sm:$0xff]
          %v1380 = vld [vmem:[%s348] sm:$0x3]
          %v1382 = vlaneseq
          %v1383 = vshrl.u32 %v1382, 7
          %v1384 = vsub.s32 0, %v1383
          %v1385 = vrot.slane %v1380, %v1384
          %v1386 = vlaneseq
          %v1387 = vshrl.u32 %v1386, 7
          %v1388 = vsub.s32 1, %v1387
          %v1389 = vrot.slane %v1380, %v1388
          %v1392 = vadd.f32 %v1376, %v1385
          %v1393 = vadd.f32 %v1377, %v1389
          %v1394 = vadd.f32 %v1378, %v1385
          %v1395 = vadd.f32 %v1379, %v1389
          %1396 = vst [vmem:[%s339] sm:$0xff] %v1392
          %1397 = vst [vmem:[%s339 + $0x8] sm:$0xff] %v1393
          %1398 = vst [vmem:[%s339 + $0x10] sm:$0xff] %v1394
          %1399 = vst [vmem:[%s339 + $0x18] sm:$0xff] %v1395
        $region60: #{tpu_custom_call.1} parent=35 // pred_fallthru
          _
        %s1400 = sand.u32 %s163, 1
        %s1401 = scalar_lea.sflag [#allocation6], %s1400
        %s1402 = sand.u32 %s163, 1
        %s1403 = smul.addr %s1402, 32
        %s1404 = scalar_lea.vmem [#allocation10], %s1403
        // Predicated region
        $region61: #{tpu_custom_call.1} parent=35 // pred_check
          %p1405 = pneg %p173
        $region62: #{tpu_custom_call.1} parent=35 // pred_check_branch
          %1407 = sbr.rel (%p1405) target = $region64
        $region63: #{tpu_custom_call.1} parent=35 // pred_region
          %s1408 = smul.u32 2, %s30
          %s1409 = smul.u32 2, %s29
          %s1411 = ssub.s32 512, 512
          %1412 = vsyncadd %s1401, %s1411
          %s1413 = smul.addr %s1408, 4
          %s1414 = sadd.s32 %s1409, %s1413
          %s1415 = smul.addr %s1414, 128
          %s1416 = scalar_lea.hbm %s4, %s1415
          %s1417 = sshll.u32 %s1404, 4
          %s1418 = int_to_ptr.vmem [resolvable:$true] %s1417
          %1423 = dma.vmem_to_hbm [thread:$0]  %s1418, 512, %s1416, %s1401, 256, 512, 16
        $region64: #{tpu_custom_call.1} parent=35 // pred_fallthru
          _
      $region36: #{tpu_custom_call.1} parent=5 // pred_fallthru
        _
      %p1424 = scmp.le.s32.totalorder 2, %s19
      // Predicated region
      $region65: #{tpu_custom_call.1} parent=5 // pred_check
        %p1425 = pneg %p1424
      $region66: #{tpu_custom_call.1} parent=5 // pred_check_branch
        %1427 = sbr.rel (%p1425) target = $region68
      $region67: #{tpu_custom_call.1} parent=5 // pred_region
        %s1428 = ssub.s32 %s19, 2
        // Predicated region
        $region69: #{tpu_custom_call.1} parent=67 // pred_check
          %p1429 = pneg %p179
        $region70: #{tpu_custom_call.1} parent=67 // pred_check_branch
          %1431 = sbr.rel (%p1429) target = $region72
        $region71: #{tpu_custom_call.1} parent=67 // pred_region
          %s1432 = sand.u32 %s164, 1
          %s1433 = scalar_lea.sflag [#allocation6], %s1432
          %s1434 = sand.u32 %s164, 1
          %s1435 = smul.addr %s1434, 32
          %s1436 = scalar_lea.vmem [#allocation10], %s1435
          %1437 = dma.done %s1433, 512
        $region72: #{tpu_custom_call.1} parent=67 // pred_fallthru
          _
      $region68: #{tpu_custom_call.1} parent=5 // pred_fallthru
        _
    $region6: #{tpu_custom_call.1} parent=1 // loop_footer
      %s23 = sadd.s32 1, %s19
    $region7: #{tpu_custom_call.1} parent=1 // loop_footer_branch
      %18 = sbr.rel target = $region3
    $region8: #{tpu_custom_call.1} parent=1 // loop_exit
      _
    %1438 = vsyncpa [#allocation5], 1
    %s1439 = scalar_lea.sflag [#allocation5], 1
    %1440 = vsyncpa %s1439, 1
    %1441 = vsyncpa [#allocation8], 1
    %s1442 = scalar_lea.sflag [#allocation8], 1
    %1443 = vsyncpa %s1442, 1
    %1444 = vsyncpa [#allocation6], 1
    %s1445 = scalar_lea.sflag [#allocation6], 1
    %1446 = vsyncpa %s1445, 1

</llo_original>
